<compile_context>
chip_gen: v7x
topology: tpu7x:2x2x1
jax: 0.10.0
libtpu: 0.0.40
codegen_flags: <defaults>
</compile_context>

<pallas_src>
import jax
import jax.numpy as jnp
from jax import lax
from jax.experimental import pallas as pl
from jax.experimental.pallas import tpu as pltpu


def _image_embedding_kernel(enc_ref, w_emb_ref, b_emb_ref, w_logit_ref,
                            emb_out_ref, vmean_out_ref):
    TBR, F = enc_ref.shape            # TBR = TB * R rows of (batch, region) pairs
    TB, J = vmean_out_ref.shape
    R = TBR // TB

    x = enc_ref[...]                                                       # (TBR, F)

    # ---- image_embedding: Linear(F -> J) as one MXU matmul over all rows ----
    emb = jnp.dot(x, w_emb_ref[...], preferred_element_type=jnp.float32)
    emb = emb + b_emb_ref[...]                                             # (TBR, J) f32
    # Store right away and re-read below: bounds the live range of the largest
    # intermediate so it aliases the output VMEM tile instead of extra scratch.
    emb_out_ref[...] = emb.astype(emb_out_ref.dtype)

    # ---- attention logits, folded onto the input side ----
    # logits = x @ (W_emb @ w_attn); the attention bias is constant per logit and
    # cancels inside the softmax, so it is omitted.  Lane-dense F-reduce on the
    # VPU/XLU: hidden under MXU/HBM slack and avoids re-reading the emb tile.
    x32 = x.astype(jnp.float32)
    logits = jnp.sum(x32 * w_logit_ref[...], axis=-1, keepdims=True)       # (TBR, 1)

    # ---- softmax over the R regions of each batch element ----
    # Only this tiny (TBR, 1) column gets a 3-D view; the emb tile stays 2-D.
    logits3 = logits.reshape(TB, R, 1)
    m3 = jnp.max(logits3, axis=1, keepdims=True)                           # (TB, 1, 1)
    e3 = jnp.exp(logits3 - m3)                                             # (TB, R, 1)
    d3 = jnp.sum(e3, axis=1, keepdims=True)                                # (TB, 1, 1)
    # approx reciprocal is safe ONLY because the softmax weights are internal:
    # the per-batch scale error is uniform within a batch and cancels exactly
    # under the L2 normalization below.  If p ever becomes an output, switch to
    # an exact divide here.
    p = (e3 * pl.reciprocal(d3, approx=True)).reshape(TBR, 1)              # (TBR, 1)

    # ---- attention-weighted sum over regions (no emb reshape) ----
    # summed[b, :] = sum_i seg[b, i] * p[i] * emb[i, :], with the 0/1
    # block-diagonal segment matrix seg[b, i] = (i // R == b).  One small MXU
    # matmul replaces a (TB, R, J) relayout + sublane reduce and works for any R.
    row = lax.broadcasted_iota(jnp.int32, (TB, TBR), 0)
    col = lax.broadcasted_iota(jnp.int32, (TB, TBR), 1)
    seg = jnp.where((col >= row * R) & (col < (row + 1) * R), 1.0, 0.0)    # (TB, TBR)

    emb_q = emb_out_ref[...].astype(jnp.float32)                           # re-read stored tile
    summed = jnp.dot(seg, p * emb_q, preferred_element_type=jnp.float32)   # (TB, J)

    # ---- L2 normalization (EUP rsqrt) ----
    # eps guards an all-zero row (the un-guarded PyTorch reference NaNs there).
    inv_norm = lax.rsqrt(jnp.sum(summed * summed, axis=-1, keepdims=True) + 1e-12)
    vmean_out_ref[...] = (summed * inv_norm).astype(vmean_out_ref.dtype)


def _round_up(x, m):
    return ((x + m - 1) // m) * m


def _plan_tiles(B, R, F, J, in_itemsize, out_itemsize):
    """Pick the batch tile TB and vmem_limit from shapes, dtypes and the
    per-generation VMEM capacity (no hardcoded TB / 32 MiB)."""
    try:
        phys = int(pltpu.get_tpu_info().vmem_capacity_bytes)
        if phys <= 0:
            raise ValueError
    except Exception:                       # no TPU info: assume v7x-sized VMEM
        phys = 64 * 1024 * 1024
    # ~48 MiB budget on v7x (64 MiB physical), ~96 MiB on v5e/v6e (128 MiB).
    budget = min(96 * 1024 * 1024, (phys * 3) // 4)

    def vmem_bytes(tb):
        tbr = tb * R
        pipe = 2 * (tbr * F * in_itemsize           # encoder tile (double-buffered)
                    + tbr * J * out_itemsize        # images_embedded tile
                    + tb * J * out_itemsize)        # v_mean tile
        params = 2 * (F * J + F + J) * 4            # resident weights/bias (worst-case 2x)
        temps = (tbr * F * 4                        # f32 view of x for the logit reduce
                 + 2 * tbr * J * 4                  # emb f32 value + p*emb product
                 + tb * tbr * 4                     # segment matrix
                 + 8 * tbr * 4)                     # logits / p / small vectors
        return pipe + params + temps

    # >= 4 grid steps when the batch allows it (2 pipelined steps per TensorCore
    # on v7x megacore); >= 2 steps for medium batches so DMA can double-buffer.
    target_steps = 4 if B >= 32 else (2 if B >= 16 else 1)
    tb_cap = max(8, _round_up(-(-B // target_steps), 8))

    fitting = [t for t in range(8, tb_cap + 1, 8) if vmem_bytes(t) <= budget]
    if fitting:
        dividing = [t for t in fitting if B % t == 0]
        tb = max(dividing) if dividing else max(fitting)
    else:
        tb = 8                                      # floor: one sublane-tile of batches
    steps = -(-B // tb)
    vmem_limit = int(min(max(budget, vmem_bytes(tb) + (4 << 20)), phys - (2 << 20)))
    return tb, steps, vmem_limit


def image_embedding_forward(encoder_output, w_emb, b_emb, w_attn, b_attn, out_dtype=None):
    """encoder_output: (B, R, F).
       w_emb: (F, J), b_emb: (J,)      -- image_embedding Linear (pre-transposed, x @ W)
       w_attn: (J, 1), b_attn: scalar  -- linear_image_embedding_weights Linear
       out_dtype: output dtype (defaults to encoder_output.dtype; bf16 halves the
                  dominant HBM stream if downstream tolerates it).
       Returns (images_embedded (B, R, J), v_mean_embedded (B, J))."""
    B, R, F = encoder_output.shape
    J = w_emb.shape[1]
    in_dtype = encoder_output.dtype
    out_dtype = jnp.dtype(out_dtype) if out_dtype is not None else jnp.dtype(in_dtype)

    TB, steps, vmem_limit = _plan_tiles(B, R, F, J,
                                        jnp.dtype(in_dtype).itemsize, out_dtype.itemsize)
    Bp = TB * steps

    # Free metadata reshape in HBM; no wrapper-side dtype munging of the big tensor.
    enc2 = encoder_output.reshape(B * R, F)
    if Bp != B:
        # Only when B does not tile evenly: pad whole batch elements with zeros
        # (one extra HBM pass) and slice them back off the outputs below.
        enc2 = jnp.pad(enc2, ((0, (Bp - B) * R), (0, 0)))

    # Small parameter prep (tiny tensors, trace-level):
    #  * MXU operands in the caller's activation dtype (bf16 in -> bf16 matmul),
    #  * attention Linear folded into the input side: w_logit = W_emb @ w_attn;
    #    its bias is constant per logit and cancels in the softmax, so dropped.
    w_emb_c = w_emb.astype(in_dtype)
    b_emb2 = b_emb.reshape(1, J).astype(jnp.float32)
    w_logit_row = jnp.dot(w_emb.astype(jnp.float32),
                          w_attn.astype(jnp.float32).reshape(J, 1)).reshape(1, F)
    del b_attn  # cancels inside the softmax; the softmax weights are never returned

    emb2, v_mean = pl.pallas_call(
        _image_embedding_kernel,
        out_shape=(
            jax.ShapeDtypeStruct((Bp * R, J), out_dtype),     # images_embedded (flat rows)
            jax.ShapeDtypeStruct((Bp, J), out_dtype),         # v_mean_embedded
        ),
        grid_spec=pltpu.PrefetchScalarGridSpec(
            num_scalar_prefetch=0,
            grid=(steps,),
            in_specs=[
                pl.BlockSpec((TB * R, F), lambda b: (b, 0)),  # encoder rows (pipelined)
                pl.BlockSpec((F, J), lambda b: (0, 0)),       # W_emb (resident)
                pl.BlockSpec((1, J), lambda b: (0, 0)),       # b_emb
                pl.BlockSpec((1, F), lambda b: (0, 0)),       # folded attention weights
            ],
            out_specs=[
                pl.BlockSpec((TB * R, J), lambda b: (b, 0)),  # images_embedded slab
                pl.BlockSpec((TB, J), lambda b: (b, 0)),      # lane-dense v_mean slab
            ],
        ),
        compiler_params=pltpu.CompilerParams(
            dimension_semantics=("parallel",),
            vmem_limit_bytes=vmem_limit,
        ),
        # TODO(synk): if an xprof trace ever shows exposed input DMA on short
        # grids, bump in_specs[0] to pipeline_mode=pl.Buffered(3).
    )(enc2, w_emb_c, b_emb2, w_logit_row)

    images_embedded = emb2[:B * R].reshape(B, R, J)           # free when Bp == B
    v_mean_embedded = v_mean[:B]
    return images_embedded, v_mean_embedded


def reference_forward(encoder_output, w_emb, b_emb, w_attn, b_attn):
    """Pure-JAX reference mirroring the PyTorch module (full f32 precision)."""
    emb = jnp.einsum("brf,fj->brj", encoder_output, w_emb,
                     precision=lax.Precision.HIGHEST) + b_emb               # (B, R, J)
    logits = jnp.einsum("brj,jo->bro", emb, w_attn,
                        precision=lax.Precision.HIGHEST) + b_attn           # (B, R, 1)
    p = jax.nn.softmax(logits, axis=1)                                      # over regions
    summed = jnp.sum(p * emb, axis=1)                                       # (B, J)
    v_mean = summed / jnp.sqrt(jnp.sum(summed ** 2, axis=-1, keepdims=True))
    return emb, v_mean


if __name__ == "__main__":
    # Small deterministic shapes: batch=16 (two grid steps of 8), regions=8,
    # image_features=64, joint_embeddings=32.
    B, R, F, J = 16, 8, 64, 32

    key = jax.random.PRNGKey(0)
    k_enc, k_wemb, k_bemb, k_wattn, k_battn = jax.random.split(key, 5)

    encoder_output = jax.random.normal(k_enc, (B, R, F), dtype=jnp.float32)
    # PyTorch Linear stores weight as (out, in); kept pre-transposed as (in, out)
    # for the kernel's x @ W convention.
    w_emb = jax.random.normal(k_wemb, (F, J), dtype=jnp.float32) * 0.1
    b_emb = jax.random.normal(k_bemb, (J,), dtype=jnp.float32) * 0.1
    w_attn = jax.random.normal(k_wattn, (J, 1), dtype=jnp.float32) * 0.1
    b_attn = jax.random.normal(k_battn, (), dtype=jnp.float32) * 0.1

    emb, v_mean = image_embedding_forward(encoder_output, w_emb, b_emb, w_attn, b_attn)
    jax.block_until_ready((emb, v_mean))

    emb_ref, v_mean_ref = reference_forward(encoder_output, w_emb, b_emb, w_attn, b_attn)
    assert emb.shape == (B, R, J) and v_mean.shape == (B, J)
    assert jnp.allclose(emb, emb_ref, atol=1e-4, rtol=1e-4)
    assert jnp.allclose(v_mean, v_mean_ref, atol=1e-3, rtol=1e-3)

    print("KERNEL_OK")
</pallas_src>

<mosaic_0001>
module attributes {stable_mosaic.version = 11 : i64} {
  func.func @_image_embedding_kernel(%arg0: i32, %arg1: memref<64x64xf32, #tpu.memory_space<vmem>>, %arg2: memref<64x32xf32, #tpu.memory_space<vmem>>, %arg3: memref<1x32xf32, #tpu.memory_space<vmem>>, %arg4: memref<1x64xf32, #tpu.memory_space<vmem>>, %arg5: memref<64x32xf32, #tpu.memory_space<vmem>>, %arg6: memref<8x32xf32, #tpu.memory_space<vmem>>) attributes {dimension_semantics = [#tpu.dimension_semantics<parallel>], iteration_bounds = array<i64: 2>, scalar_prefetch = 0 : i64, scratch_operands = 0 : i64, tpu.core_type = #tpu.core_type<tc>, window_params = [{transform_indices = @transform_0, window_bounds = array<i64: 64, 64>}, {pipeline_mode = #tpu.pipeline_mode<synchronous>, transform_indices = @transform_1, window_bounds = array<i64: 64, 32>}, {pipeline_mode = #tpu.pipeline_mode<synchronous>, transform_indices = @transform_2, window_bounds = array<i64: 1, 32>}, {pipeline_mode = #tpu.pipeline_mode<synchronous>, transform_indices = @transform_3, window_bounds = array<i64: 1, 64>}, {transform_indices = @transform_4, window_bounds = array<i64: 64, 32>}, {transform_indices = @transform_5, window_bounds = array<i64: 8, 32>}]} {
    %c0 = arith.constant 0 : index
    %c0_0 = arith.constant 0 : index
    %0 = vector.load %arg1[%c0, %c0_0] : memref<64x64xf32, #tpu.memory_space<vmem>>, vector<64x64xf32>
    %c0_1 = arith.constant 0 : index
    %c0_2 = arith.constant 0 : index
    %1 = vector.load %arg2[%c0_1, %c0_2] : memref<64x32xf32, #tpu.memory_space<vmem>>, vector<64x32xf32>
    %cst = arith.constant dense<0.000000e+00> : vector<64x32xf32>
    %2 = tpu.matmul %0, %1, %cst {dimension_numbers = #tpu.dot_dimension_numbers<[1], [0], [0], [1], [0, 0, 1, 1], [], []>} : vector<64x64xf32>, vector<64x32xf32>, vector<64x32xf32> -> vector<64x32xf32>
    %c0_3 = arith.constant 0 : index
    %c0_4 = arith.constant 0 : index
    %3 = vector.load %arg3[%c0_3, %c0_4] : memref<1x32xf32, #tpu.memory_space<vmem>>, vector<1x32xf32>
    %4 = vector.broadcast %3 : vector<1x32xf32> to vector<64x32xf32>
    %5 = arith.addf %2, %4 : vector<64x32xf32>
    %c0_5 = arith.constant 0 : index
    %c0_6 = arith.constant 0 : index
    %6 = vector.load %arg5[%c0_5, %c0_6] : memref<64x32xf32, #tpu.memory_space<vmem>>, vector<64x32xf32>
    tpu.vector_store %arg5[%c0_5, %c0_6], %5 {strides = array<i32>} : memref<64x32xf32, #tpu.memory_space<vmem>>, vector<64x32xf32>,
    %c0_7 = arith.constant 0 : index
    %c0_8 = arith.constant 0 : index
    %7 = vector.load %arg4[%c0_7, %c0_8] : memref<1x64xf32, #tpu.memory_space<vmem>>, vector<1x64xf32>
    %8 = vector.broadcast %7 : vector<1x64xf32> to vector<64x64xf32>
    %9 = arith.mulf %0, %8 : vector<64x64xf32>
    %cst_9 = arith.constant dense<0.000000e+00> : vector<64xf32>
    %10 = vector.multi_reduction <add>, %9, %cst_9 [1] : vector<64x64xf32> to vector<64xf32>
    %11 = vector.shape_cast %10 : vector<64xf32> to vector<64x1xf32>
    %12 = vector.shape_cast %11 : vector<64x1xf32> to vector<8x8x1xf32>
    %cst_10 = arith.constant dense<0xFF800000> : vector<8x1xf32>
    %13 = vector.multi_reduction <maximumf>, %12, %cst_10 [1] : vector<8x8x1xf32> to vector<8x1xf32>
    %14 = vector.shape_cast %13 : vector<8x1xf32> to vector<8x1x1xf32>
    %15 = vector.broadcast %14 : vector<8x1x1xf32> to vector<8x8x1xf32>
    %16 = arith.subf %12, %15 : vector<8x8x1xf32>
    %17 = math.exp %16 : vector<8x8x1xf32>
    %cst_11 = arith.constant dense<0.000000e+00> : vector<8x1xf32>
    %18 = vector.multi_reduction <add>, %17, %cst_11 [1] : vector<8x8x1xf32> to vector<8x1xf32>
    %19 = vector.shape_cast %18 : vector<8x1xf32> to vector<8x1x1xf32>
    %20 = tpu.reciprocal %19 {approx = true} : vector<8x1x1xf32> -> vector<8x1x1xf32>
    %21 = vector.broadcast %20 : vector<8x1x1xf32> to vector<8x8x1xf32>
    %22 = arith.mulf %17, %21 : vector<8x8x1xf32>
    %23 = vector.shape_cast %22 : vector<8x8x1xf32> to vector<64x1xf32>
    %24 = tpu.iota {dimensions = array<i32: 0>} : vector<8x64xi32>
    %25 = tpu.iota {dimensions = array<i32: 1>} : vector<8x64xi32>
    %c8_i32 = arith.constant 8 : i32
    %26 = vector.broadcast %c8_i32 : i32 to vector<8x64xi32>
    %27 = arith.muli %24, %26 : vector<8x64xi32>
    %28 = arith.cmpi sge, %25, %27 : vector<8x64xi32>
    %c1_i32 = arith.constant 1 : i32
    %29 = vector.broadcast %c1_i32 : i32 to vector<8x64xi32>
    %30 = arith.addi %24, %29 : vector<8x64xi32>
    %c8_i32_12 = arith.constant 8 : i32
    %31 = vector.broadcast %c8_i32_12 : i32 to vector<8x64xi32>
    %32 = arith.muli %30, %31 : vector<8x64xi32>
    %33 = arith.cmpi slt, %25, %32 : vector<8x64xi32>
    %34 = arith.andi %28, %33 : vector<8x64xi1>
    %cst_13 = arith.constant 1.000000e+00 : f32
    %cst_14 = arith.constant 0.000000e+00 : f32
    %35 = vector.broadcast %cst_13 : f32 to vector<8x64xf32>
    %36 = vector.broadcast %cst_14 : f32 to vector<8x64xf32>
    %37 = arith.select %34, %35, %36 : vector<8x64xi1>, vector<8x64xf32>
    %c0_15 = arith.constant 0 : index
    %c0_16 = arith.constant 0 : index
    %38 = vector.load %arg5[%c0_15, %c0_16] : memref<64x32xf32, #tpu.memory_space<vmem>>, vector<64x32xf32>
    %39 = vector.broadcast %23 : vector<64x1xf32> to vector<64x32xf32>
    %40 = arith.mulf %39, %38 : vector<64x32xf32>
    %cst_17 = arith.constant dense<0.000000e+00> : vector<8x32xf32>
    %41 = tpu.matmul %37, %40, %cst_17 {dimension_numbers = #tpu.dot_dimension_numbers<[1], [0], [0], [1], [0, 0, 1, 1], [], []>} : vector<8x64xf32>, vector<64x32xf32>, vector<8x32xf32> -> vector<8x32xf32>
    %42 = arith.mulf %41, %41 : vector<8x32xf32>
    %cst_18 = arith.constant dense<0.000000e+00> : vector<8xf32>
    %43 = vector.multi_reduction <add>, %42, %cst_18 [1] : vector<8x32xf32> to vector<8xf32>
    %44 = vector.shape_cast %43 : vector<8xf32> to vector<8x1xf32>
    %cst_19 = arith.constant 9.99999996E-13 : f32
    %45 = vector.broadcast %cst_19 : f32 to vector<8x1xf32>
    %46 = arith.addf %44, %45 : vector<8x1xf32>
    %47 = math.rsqrt %46 : vector<8x1xf32>
    %48 = vector.broadcast %47 : vector<8x1xf32> to vector<8x32xf32>
    %49 = arith.mulf %41, %48 : vector<8x32xf32>
    %c0_20 = arith.constant 0 : index
    %c0_21 = arith.constant 0 : index
    %50 = vector.load %arg6[%c0_20, %c0_21] : memref<8x32xf32, #tpu.memory_space<vmem>>, vector<8x32xf32>
    tpu.vector_store %arg6[%c0_20, %c0_21], %49 {strides = array<i32>} : memref<8x32xf32, #tpu.memory_space<vmem>>, vector<8x32xf32>,
    return
  }
  func.func @transform_0(%arg0: i32) -> (i32, i32) {
    %c0_i32 = arith.constant 0 : i32
    %c0_i32_0 = arith.constant 0 : i32
    return %arg0, %c0_i32 : i32, i32
  }
  func.func @transform_1(%arg0: i32) -> (i32, i32) {
    %c0_i32 = arith.constant 0 : i32
    %c0_i32_0 = arith.constant 0 : i32
    %c0_i32_1 = arith.constant 0 : i32
    return %c0_i32, %c0_i32_0 : i32, i32
  }
  func.func @transform_2(%arg0: i32) -> (i32, i32) {
    %c0_i32 = arith.constant 0 : i32
    %c0_i32_0 = arith.constant 0 : i32
    %c0_i32_1 = arith.constant 0 : i32
    return %c0_i32, %c0_i32_0 : i32, i32
  }
  func.func @transform_3(%arg0: i32) -> (i32, i32) {
    %c0_i32 = arith.constant 0 : i32
    %c0_i32_0 = arith.constant 0 : i32
    %c0_i32_1 = arith.constant 0 : i32
    return %c0_i32, %c0_i32_0 : i32, i32
  }
  func.func @transform_4(%arg0: i32) -> (i32, i32) {
    %c0_i32 = arith.constant 0 : i32
    %c0_i32_0 = arith.constant 0 : i32
    return %arg0, %c0_i32 : i32, i32
  }
  func.func @transform_5(%arg0: i32) -> (i32, i32) {
    %c0_i32 = arith.constant 0 : i32
    %c0_i32_0 = arith.constant 0 : i32
    return %arg0, %c0_i32 : i32, i32
  }
}

</mosaic_0001>

<llo_original>
// kernel: tpu_custom_call.1
$region0: #{tpu_custom_call.1}
  #allocation0 [shape = 'u32[]', space=smem, size = 0x4, offset = 0x4, fixed_abs, tag = 'smem constant byte address 0x4 - core index']
  #allocation1 [shape = 'u32[144,128]{1,0:T(1,128)}', space=vmem, size = 0x12000, scoped, tag = 'internal scratch']
  %s0 = inlined_call_operand.vmem [shape: f32[128,64], index: 0, kind: input, shape index: {}]
  %s1 = inlined_call_operand.vmem [shape: f32[64,32], index: 1, kind: input, shape index: {}]
  %s2 = inlined_call_operand.vmem [shape: f32[1,32], index: 2, kind: input, shape index: {}]
  %s3 = inlined_call_operand.vmem [shape: f32[1,64], index: 3, kind: input, shape index: {}]
  %s4 = inlined_call_operand.vmem [shape: f32[128,32], index: 4, kind: output, shape index: {0}]
  %s5 = inlined_call_operand.hbm [shape: f32[16,32], index: 5, kind: output, shape index: {1}]
  %6 = xla_tuple %s4, %s5
  %s7 = sld [smem:[#allocation0]]
  $region57: #{tpu_custom_call.1} parent=0
    _
  %s9 = ssub.s32 1, %s7
  %s10 = scalar_select 0, %s9, %s7
  $region1: #{tpu_custom_call.1} parent=0
    #allocation2 [shape = 'u8[8192]{0}', space=vmem, size = 0x2000, scoped, tag = 'output window, operand 1']
    #allocation3 [shape = 's32[2]{0}', space=sflag, size = 0x8, scoped, tag = 'scoped memory for tpu_custom_call.1']
    %11 = vsyncpa [#allocation3], 0
    %s12 = scalar_lea.sflag [#allocation3], 1
    %13 = vsyncpa %s12, 0
    loop: start=0, step=1, limit=4
    $region2: #{tpu_custom_call.1} parent=1 // loop_pre_header
      _
    $region3: #{tpu_custom_call.1} parent=1 // loop_header
      %s15 = sphi 0, %s19
      %p16 = scmp.ge.s32.totalorder %s15, 4
      %s25 = sphi 0, %s27
      %s28 = sphi 0, %s25
      %s29 = sphi 0, %s28
      %s45 = sphi 0, %s29
      %s49 = sphi 0, %s49
      %s51 = sphi 0, %s49
      %s52 = sphi 0, %s51
      %s66 = sphi 0, %s52
      %s70 = sphi 0, %s70
      %s72 = sphi 0, %s70
      %s73 = sphi 0, %s72
      %s87 = sphi 0, %s73
      %s91 = sphi 0, %s91
      %s93 = sphi 0, %s91
      %s94 = sphi 0, %s93
      %s108 = sphi 0, %s94
      %s114 = sphi 0, %s116
      %s117 = sphi 0, %s114
      %s118 = sphi 0, %s117
      %s134 = sphi 0, %s118
      %s140 = sphi 0, %s142
      %s143 = sphi 0, %s140
      %s144 = sphi 0, %s143
      %s160 = sphi 0, %s144
    $region4: #{tpu_custom_call.1} parent=1 // loop_header_branch
      %18 = sbr.rel (%p16) target = $region8
    $region5: #{tpu_custom_call.1} parent=1 // loop_body
      %s20 = ssub.s32 %s15, 1
      %s21 = ssub.s32 %s15, 2
      %s22 = sadd.s32 %s15, 1
      %s23 = ssub.s32 %s15, %s22
      %p24 = scmp.eq.s32.totalorder %s23, 0
      %s26 = sadd.s32 %s25, 1
      %s27 = scalar_select %p24, %s25, %s26
      %p30 = pneg %p24
      %p31 = scmp.eq.s32.totalorder %s15, 1
      %p32 = por %p30, %p31
      %p33 = scmp.ne.s32.totalorder %s25, %s28
      %p34 = scmp.eq.s32.totalorder %s15, 0
      %p35 = por %p33, %p34
      %p36 = scmp.ne.s32.totalorder %s25, %s28
      %p37 = scmp.eq.s32.totalorder %s20, 1
      %p38 = por %p36, %p37
      %p39 = scmp.ne.s32.totalorder %s28, %s29
      %p40 = scmp.eq.s32.totalorder %s20, 0
      %p41 = por %p39, %p40
      %p42 = scmp.ne.s32.totalorder %s28, %s29
      %p43 = scmp.eq.s32.totalorder %s21, 1
      %p44 = por %p42, %p43
      %p46 = scmp.ne.s32.totalorder %s29, %s45
      %p47 = scmp.eq.s32.totalorder %s21, 0
      %p48 = por %p46, %p47
      %s50 = sadd.s32 %s49, 1
      %p53 = scmp.eq.s32.totalorder %s15, 1
      %p54 = scmp.ne.s32.totalorder %s49, %s51
      %p55 = scmp.eq.s32.totalorder %s15, 0
      %p56 = por %p54, %p55
      %p57 = scmp.ne.s32.totalorder %s49, %s51
      %p58 = scmp.eq.s32.totalorder %s20, 1
      %p59 = por %p57, %p58
      %p60 = scmp.ne.s32.totalorder %s51, %s52
      %p61 = scmp.eq.s32.totalorder %s20, 0
      %p62 = por %p60, %p61
      %p63 = scmp.ne.s32.totalorder %s51, %s52
      %p64 = scmp.eq.s32.totalorder %s21, 1
      %p65 = por %p63, %p64
      %p67 = scmp.ne.s32.totalorder %s52, %s66
      %p68 = scmp.eq.s32.totalorder %s21, 0
      %p69 = por %p67, %p68
      %s71 = sadd.s32 %s70, 1
      %p74 = scmp.eq.s32.totalorder %s15, 1
      %p75 = scmp.ne.s32.totalorder %s70, %s72
      %p76 = scmp.eq.s32.totalorder %s15, 0
      %p77 = por %p75, %p76
      %p78 = scmp.ne.s32.totalorder %s70, %s72
      %p79 = scmp.eq.s32.totalorder %s20, 1
      %p80 = por %p78, %p79
      %p81 = scmp.ne.s32.totalorder %s72, %s73
      %p82 = scmp.eq.s32.totalorder %s20, 0
      %p83 = por %p81, %p82
      %p84 = scmp.ne.s32.totalorder %s72, %s73
      %p85 = scmp.eq.s32.totalorder %s21, 1
      %p86 = por %p84, %p85
      %p88 = scmp.ne.s32.totalorder %s73, %s87
      %p89 = scmp.eq.s32.totalorder %s21, 0
      %p90 = por %p88, %p89
      %s92 = sadd.s32 %s91, 1
      %p95 = scmp.eq.s32.totalorder %s15, 1
      %p96 = scmp.ne.s32.totalorder %s91, %s93
      %p97 = scmp.eq.s32.totalorder %s15, 0
      %p98 = por %p96, %p97
      %p99 = scmp.ne.s32.totalorder %s91, %s93
      %p100 = scmp.eq.s32.totalorder %s20, 1
      %p101 = por %p99, %p100
      %p102 = scmp.ne.s32.totalorder %s93, %s94
      %p103 = scmp.eq.s32.totalorder %s20, 0
      %p104 = por %p102, %p103
      %p105 = scmp.ne.s32.totalorder %s93, %s94
      %p106 = scmp.eq.s32.totalorder %s21, 1
      %p107 = por %p105, %p106
      %p109 = scmp.ne.s32.totalorder %s94, %s108
      %p110 = scmp.eq.s32.totalorder %s21, 0
      %p111 = por %p109, %p110
      %s112 = ssub.s32 %s15, %s22
      %p113 = scmp.eq.s32.totalorder %s112, 0
      %s115 = sadd.s32 %s114, 1
      %s116 = scalar_select %p113, %s114, %s115
      %p119 = pneg %p113
      %p120 = scmp.eq.s32.totalorder %s15, 1
      %p121 = por %p119, %p120
      %p122 = scmp.ne.s32.totalorder %s114, %s117
      %p123 = scmp.eq.s32.totalorder %s15, 0
      %p124 = por %p122, %p123
      %p125 = scmp.ne.s32.totalorder %s114, %s117
      %p126 = scmp.eq.s32.totalorder %s20, 1
      %p127 = por %p125, %p126
      %p128 = scmp.ne.s32.totalorder %s117, %s118
      %p129 = scmp.eq.s32.totalorder %s20, 0
      %p130 = por %p128, %p129
      %p131 = scmp.ne.s32.totalorder %s117, %s118
      %p132 = scmp.eq.s32.totalorder %s21, 1
      %p133 = por %p131, %p132
      %p135 = scmp.ne.s32.totalorder %s118, %s134
      %p136 = scmp.eq.s32.totalorder %s21, 0
      %p137 = por %p135, %p136
      %s138 = ssub.s32 %s15, %s22
      %p139 = scmp.eq.s32.totalorder %s138, 0
      %s141 = sadd.s32 %s140, 1
      %s142 = scalar_select %p139, %s140, %s141
      %p145 = pneg %p139
      %p146 = scmp.eq.s32.totalorder %s15, 1
      %p147 = por %p145, %p146
      %p148 = scmp.ne.s32.totalorder %s140, %s143
      %p149 = scmp.eq.s32.totalorder %s15, 0
      %p150 = por %p148, %p149
      %p151 = scmp.ne.s32.totalorder %s140, %s143
      %p152 = scmp.eq.s32.totalorder %s20, 1
      %p153 = por %p151, %p152
      %p154 = scmp.ne.s32.totalorder %s143, %s144
      %p155 = scmp.eq.s32.totalorder %s20, 0
      %p156 = por %p154, %p155
      %p157 = scmp.ne.s32.totalorder %s143, %s144
      %p158 = scmp.eq.s32.totalorder %s21, 1
      %p159 = por %p157, %p158
      %p161 = scmp.ne.s32.totalorder %s144, %s160
      %p162 = scmp.eq.s32.totalorder %s21, 0
      %p163 = por %p161, %p162
      %p164 = scmp.le.s32.totalorder 1, %s15
      %p165 = scmp.lt.s32.totalorder %s15, 3
      %p166 = pnand %p164, %p165
      %p167 = pneg %p166
      // Predicated region
      $region9: #{tpu_custom_call.1} parent=5 // pred_check
        _
      $region10: #{tpu_custom_call.1} parent=5 // pred_check_branch
        %169 = sbr.rel (%p166) target = $region12
      $region11: #{tpu_custom_call.1} parent=5 // pred_region
        %s170 = ssub.s32 %s15, 1
        // Predicated region
        $region13: #{tpu_custom_call.1} parent=11 // pred_check
          %p171 = pneg %p62
        $region14: #{tpu_custom_call.1} parent=11 // pred_check_branch
          %173 = sbr.rel (%p171) target = $region16
        $region15: #{tpu_custom_call.1} parent=11 // pred_region
          _
        $region16: #{tpu_custom_call.1} parent=11 // pred_fallthru
          _
        // Predicated region
        $region17: #{tpu_custom_call.1} parent=11 // pred_check
          %p174 = pneg %p83
        $region18: #{tpu_custom_call.1} parent=11 // pred_check_branch
          %176 = sbr.rel (%p174) target = $region20
        $region19: #{tpu_custom_call.1} parent=11 // pred_region
          _
        $region20: #{tpu_custom_call.1} parent=11 // pred_fallthru
          _
        // Predicated region
        $region21: #{tpu_custom_call.1} parent=11 // pred_check
          %p177 = pneg %p104
        $region22: #{tpu_custom_call.1} parent=11 // pred_check_branch
          %179 = sbr.rel (%p177) target = $region24
        $region23: #{tpu_custom_call.1} parent=11 // pred_region
          _
        $region24: #{tpu_custom_call.1} parent=11 // pred_fallthru
          _
      $region12: #{tpu_custom_call.1} parent=5 // pred_fallthru
        _
      %p180 = scmp.lt.s32.totalorder %s15, 2
      // Predicated region
      $region25: #{tpu_custom_call.1} parent=5 // pred_check
        %p181 = pneg %p180
      $region26: #{tpu_custom_call.1} parent=5 // pred_check_branch
        %183 = sbr.rel (%p181) target = $region28
      $region27: #{tpu_custom_call.1} parent=5 // pred_region
        // Predicated region
        $region29: #{tpu_custom_call.1} parent=27 // pred_check
          %p184 = pneg %p35
        $region30: #{tpu_custom_call.1} parent=27 // pred_check_branch
          %186 = sbr.rel (%p184) target = $region32
        $region31: #{tpu_custom_call.1} parent=27 // pred_region
          %s187 = smul.u32 8, %s15
          %p188 = scmp.lt.s32.totalorder %s187, 15
          %s189 = scalar_select %p188, %s187, 15
          %s190 = smul.addr %s189, 8
          %s191 = scalar_lea.vmem %s0, %s190
          %s192 = smul.u32 8, %s15
        $region32: #{tpu_custom_call.1} parent=27 // pred_fallthru
          _
      $region28: #{tpu_custom_call.1} parent=5 // pred_fallthru
        _
      %p193 = scmp.le.s32.totalorder 1, %s15
      %p194 = scmp.lt.s32.totalorder %s15, 3
      %p195 = pnand %p193, %p194
      %p196 = pneg %p195
      // Predicated region
      $region33: #{tpu_custom_call.1} parent=5 // pred_check
        _
      $region34: #{tpu_custom_call.1} parent=5 // pred_check_branch
        %198 = sbr.rel (%p195) target = $region36
      $region35: #{tpu_custom_call.1} parent=5 // pred_region
        %s199 = ssub.s32 %s15, 1
        %s200 = smul.u32 8, %s20
        %p201 = scmp.lt.s32.totalorder %s200, 15
        %s202 = scalar_select %p201, %s200, 15
        %s203 = smul.addr %s202, 8
        %s204 = scalar_lea.vmem %s0, %s203
        %p205 = pneg %p41
        %p206 = pneg %p38
        %p207 = pneg %p62
        %p208 = pneg %p59
        %p209 = pneg %p83
        %p210 = pneg %p80
        %p211 = pneg %p104
        %p212 = pneg %p101
        %p213 = pneg %p130
        %p214 = pneg %p127
        %s215 = smul.u32 8, %s20
        %p216 = scmp.lt.s32.totalorder %s215, 15
        %s217 = scalar_select %p216, %s215, 15
        %s218 = smul.addr %s217, 8
        %s219 = scalar_lea.vmem %s4, %s218
        %p220 = pneg %p156
        %p221 = pneg %p153
        %s222 = sand.u32 %s143, 1
        %s223 = scalar_lea.sflag [#allocation3], %s222
        %s224 = sand.u32 %s143, 1
        %s225 = smul.addr %s224, 8
        %s226 = scalar_lea.vmem [#allocation2], %s225
        %s227 = smul.u32 8, %s20
        %p228 = scmp.lt.s32.totalorder %s227, 15
        %s229 = scalar_select %p228, %s227, 15
        %s230 = smul.addr %s229, 8
        %s231 = scalar_lea.vmem %s0, %s230
        %s232 = smul.u32 8, %s20
        %s233 = smul.u32 8, %s20
        %p234 = scmp.lt.s32.totalorder %s233, 15
        %s235 = scalar_select %p234, %s233, 15
        %s236 = smul.addr %s235, 8
        %s237 = scalar_lea.vmem %s4, %s236
        %s238 = smul.u32 8, %s20
        %v239 = vld [vmem:[%s231] sm:$0xff]
        %v240 = vld [vmem:[%s231 + $0x8] sm:$0xff]
        %v241 = vld [vmem:[%s231 + $0x10] sm:$0xff]
        %v242 = vld [vmem:[%s231 + $0x18] sm:$0xff]
        %v243 = vld [vmem:[%s231 + $0x20] sm:$0xff]
        %v244 = vld [vmem:[%s231 + $0x28] sm:$0xff]
        %v245 = vld [vmem:[%s231 + $0x30] sm:$0xff]
        %v246 = vld [vmem:[%s231 + $0x38] sm:$0xff]
        %v247 = vld [vmem:[%s1] sm:$0xff]
        %v248 = vld [vmem:[%s1 + $0x8] sm:$0xff]
        %v249 = vld [vmem:[%s1 + $0x10] sm:$0xff]
        %v250 = vld [vmem:[%s1 + $0x18] sm:$0xff]
        %v251 = vld [vmem:[%s1 + $0x20] sm:$0xff]
        %v252 = vld [vmem:[%s1 + $0x28] sm:$0xff]
        %v253 = vld [vmem:[%s1 + $0x30] sm:$0xff]
        %v254 = vld [vmem:[%s1 + $0x38] sm:$0xff]
        %v255 = vld [vmem:[%s2] sm:$0x1]
        %v257 = vlaneseq
        %v258 = vshrl.u32 %v257, 7
        %v259 = vsub.s32 0, %v258
        %v260 = vrot.slane %v255, %v259
        %vm262 = vcmask 523264
        %v264 = vsel %vm262, %v239, 0
        %v267 = vsel %vm262, %v240, 0
        %v270 = vsel %vm262, %v241, 0
        %v273 = vsel %vm262, %v242, 0
        %v276 = vsel %vm262, %v243, 0
        %v279 = vsel %vm262, %v244, 0
        %v282 = vsel %vm262, %v245, 0
        %v285 = vsel %vm262, %v246, 0
        %287 = vmatprep.subr.mxu0 0.0
        %288 = vmatpush1.msra.mxu0 %v247
        %289 = vmatprep.subr.mxu0 0.0
        %290 = vmatpush1.msra.mxu0 %v248
        %291 = vmatprep.subr.mxu0 0.0
        %292 = vmatpush1.msra.mxu0 %v249
        %293 = vmatprep.subr.mxu0 0.0
        %294 = vmatpush1.msra.mxu0 %v250
        %295 = vmatprep.subr.mxu0 0.0
        %296 = vmatpush1.msra.mxu0 %v251
        %297 = vmatprep.subr.mxu0 0.0
        %298 = vmatpush1.msra.mxu0 %v252
        %299 = vmatprep.subr.mxu0 0.0
        %300 = vmatpush1.msra.mxu0 %v253
        %301 = vmatprep.subr.mxu0 0.0
        %302 = vmatpush1.msra.mxu0 %v254
        %303 = vmatprep.subr.mxu0 0.0
        %304 = vmatpush1.msra.mxu0 0.0
        %305 = vmatprep.subr.mxu0 0.0
        %306 = vmatpush1.msra.mxu0 0.0
        %307 = vmatprep.subr.mxu0 0.0
        %308 = vmatpush1.msra.mxu0 0.0
        %309 = vmatprep.subr.mxu0 0.0
        %310 = vmatpush1.msra.mxu0 0.0
        %311 = vmatprep.subr.mxu0 0.0
        %312 = vmatpush1.msra.mxu0 0.0
        %313 = vmatprep.subr.mxu0 0.0
        %314 = vmatpush1.msra.mxu0 0.0
        %315 = vmatprep.subr.mxu0 0.0
        %316 = vmatpush1.msra.mxu0 0.0
        %317 = vmatprep.subr.mxu0 0.0
        %318 = vmatpush1.msra.mxu0 0.0
        %319 = vmatprep.subr.mxu0 0.0
        %320 = vmatpush1.msra.mxu0 0.0
        %321 = vmatprep.subr.mxu0 0.0
        %322 = vmatpush1.msra.mxu0 0.0
        %323 = vmatprep.subr.mxu0 0.0
        %324 = vmatpush1.msra.mxu0 0.0
        %325 = vmatprep.subr.mxu0 0.0
        %326 = vmatpush1.msra.mxu0 0.0
        %327 = vmatprep.subr.mxu0 0.0
        %328 = vmatpush1.msra.mxu0 0.0
        %329 = vmatprep.subr.mxu0 0.0
        %330 = vmatpush1.msra.mxu0 0.0
        %331 = vmatprep.subr.mxu0 0.0
        %332 = vmatpush1.msra.mxu0 0.0
        %333 = vmatprep.subr.mxu0 0.0
        %334 = vmatpush1.msra.mxu0 0.0
        %335 = vmatprep.subr.mxu0 0.0
        %336 = vmatpush1.msra.mxu0 0.0
        %337 = vmatprep.subr.mxu0 0.0
        %338 = vmatpush1.msra.mxu0 0.0
        %339 = vmatprep.subr.mxu0 0.0
        %340 = vmatpush1.msra.mxu0 0.0
        %341 = vmatprep.subr.mxu0 0.0
        %342 = vmatpush1.msra.mxu0 0.0
        %343 = vmatprep.subr.mxu0 0.0
        %344 = vmatpush1.msra.mxu0 0.0
        %345 = vmatprep.subr.mxu0 0.0
        %346 = vmatpush1.msra.mxu0 0.0
        %347 = vmatprep.subr.mxu0 0.0
        %348 = vmatpush1.msra.mxu0 0.0
        %349 = vmatprep.subr.mxu0 0.0
        %350 = vmatpush1.msra.mxu0 0.0
        %351 = vmatprep.mubr.f32.mxu0 0.0
        %352 = vmatmul.mubr.f32.gmra.mrb[0].mxu0 %v264
        %v353 = vpop.f32.mrb[0].mxu0
        %v354 = vadd.f32 %v260, %v353
        %v355 = vpop.f32.mrb[0].mxu0
        %356 = vmatprep.mubr.f32.mxu0 0.0
        %357 = vmatmul.mubr.f32.gmra.mrb[0].mxu0 %v267
        %v358 = vpop.f32.mrb[0].mxu0
        %v359 = vadd.f32 %v260, %v358
        %v360 = vpop.f32.mrb[0].mxu0
        %361 = vmatprep.mubr.f32.mxu0 0.0
        %362 = vmatmul.mubr.f32.gmra.mrb[0].mxu0 %v270
        %v363 = vpop.f32.mrb[0].mxu0
        %v364 = vadd.f32 %v260, %v363
        %v365 = vpop.f32.mrb[0].mxu0
        %366 = vmatprep.mubr.f32.mxu0 0.0
        %367 = vmatmul.mubr.f32.gmra.mrb[0].mxu0 %v273
        %v368 = vpop.f32.mrb[0].mxu0
        %v369 = vadd.f32 %v260, %v368
        %v370 = vpop.f32.mrb[0].mxu0
        %371 = vmatprep.mubr.f32.mxu0 0.0
        %372 = vmatmul.mubr.f32.gmra.mrb[0].mxu0 %v276
        %v373 = vpop.f32.mrb[0].mxu0
        %v374 = vadd.f32 %v260, %v373
        %v375 = vpop.f32.mrb[0].mxu0
        %376 = vmatprep.mubr.f32.mxu0 0.0
        %377 = vmatmul.mubr.f32.gmra.mrb[0].mxu0 %v279
        %v378 = vpop.f32.mrb[0].mxu0
        %v379 = vadd.f32 %v260, %v378
        %v380 = vpop.f32.mrb[0].mxu0
        %381 = vmatprep.mubr.f32.mxu0 0.0
        %382 = vmatmul.mubr.f32.gmra.mrb[0].mxu0 %v282
        %v383 = vpop.f32.mrb[0].mxu0
        %v384 = vadd.f32 %v260, %v383
        %v385 = vpop.f32.mrb[0].mxu0
        %386 = vmatprep.mubr.f32.mxu0 0.0
        %387 = vmatmul.mubr.f32.gmra.mrb[0].mxu0 %v285
        %v388 = vpop.f32.mrb[0].mxu0
        %v389 = vadd.f32 %v260, %v388
        %v390 = vpop.f32.mrb[0].mxu0
        %391 = vdwg.mxu0
        %vm392 = vcmask 261120
        %393 = vst.msk [vmem:[%s237] sm:$0xff] %vm392, %v354
        %394 = vst.msk [vmem:[%s237 + $0x8] sm:$0xff] %vm392, %v359
        %395 = vst.msk [vmem:[%s237 + $0x10] sm:$0xff] %vm392, %v364
        %396 = vst.msk [vmem:[%s237 + $0x18] sm:$0xff] %vm392, %v369
        %397 = vst.msk [vmem:[%s237 + $0x20] sm:$0xff] %vm392, %v374
        %398 = vst.msk [vmem:[%s237 + $0x28] sm:$0xff] %vm392, %v379
        %399 = vst.msk [vmem:[%s237 + $0x30] sm:$0xff] %vm392, %v384
        %400 = vst.msk [vmem:[%s237 + $0x38] sm:$0xff] %vm392, %v389
        %v401 = vld [vmem:[%s3] sm:$0x1]
        %v403 = vlaneseq
        %v404 = vshrl.u32 %v403, 7
        %v405 = vsub.s32 0, %v404
        %v406 = vrot.slane %v401, %v405
        %v408 = vmul.f32 %v239, %v406
        %v409 = vmul.f32 %v240, %v406
        %v410 = vmul.f32 %v241, %v406
        %v411 = vmul.f32 %v242, %v406
        %v412 = vmul.f32 %v243, %v406
        %v413 = vmul.f32 %v244, %v406
        %v414 = vmul.f32 %v245, %v406
        %v415 = vmul.f32 %v246, %v406
        %v416 = vsel %vm262, %v408, 0.0
        %417 = vadd.xlane.f32.xlu0 %v416
        %v418 = vpop.xlane.xlu0 %417
        %v419 = vsel %vm262, %v409, 0.0
        %420 = vadd.xlane.f32.xlu0 %v419
        %v421 = vpop.xlane.xlu0 %420
        %v422 = vsel %vm262, %v410, 0.0
        %423 = vadd.xlane.f32.xlu0 %v422
        %v424 = vpop.xlane.xlu0 %423
        %v425 = vsel %vm262, %v411, 0.0
        %426 = vadd.xlane.f32.xlu0 %v425
        %v427 = vpop.xlane.xlu0 %426
        %v428 = vsel %vm262, %v412, 0.0
        %429 = vadd.xlane.f32.xlu0 %v428
        %v430 = vpop.xlane.xlu0 %429
        %v431 = vsel %vm262, %v413, 0.0
        %432 = vadd.xlane.f32.xlu0 %v431
        %v433 = vpop.xlane.xlu0 %432
        %v434 = vsel %vm262, %v414, 0.0
        %435 = vadd.xlane.f32.xlu0 %v434
        %v436 = vpop.xlane.xlu0 %435
        %v437 = vsel %vm262, %v415, 0.0
        %438 = vadd.xlane.f32.xlu0 %v437
        %v439 = vpop.xlane.xlu0 %438
        %v440 = vrot.slane %v418, 4
        %v441 = vmax.f32 %v418, %v440
        %v442 = vrot.slane %v441, 2
        %v443 = vmax.f32 %v441, %v442
        %v444 = vrot.slane %v443, 1
        %v445 = vmax.f32 %v443, %v444
        %v446 = vrot.slane %v421, 4
        %v447 = vmax.f32 %v421, %v446
        %v448 = vrot.slane %v447, 2
        %v449 = vmax.f32 %v447, %v448
        %v450 = vrot.slane %v449, 1
        %v451 = vmax.f32 %v449, %v450
        %v452 = vrot.slane %v424, 4
        %v453 = vmax.f32 %v424, %v452
        %v454 = vrot.slane %v453, 2
        %v455 = vmax.f32 %v453, %v454
        %v456 = vrot.slane %v455, 1
        %v457 = vmax.f32 %v455, %v456
        %v458 = vrot.slane %v427, 4
        %v459 = vmax.f32 %v427, %v458
        %v460 = vrot.slane %v459, 2
        %v461 = vmax.f32 %v459, %v460
        %v462 = vrot.slane %v461, 1
        %v463 = vmax.f32 %v461, %v462
        %v464 = vrot.slane %v430, 4
        %v465 = vmax.f32 %v430, %v464
        %v466 = vrot.slane %v465, 2
        %v467 = vmax.f32 %v465, %v466
        %v468 = vrot.slane %v467, 1
        %v469 = vmax.f32 %v467, %v468
        %v470 = vrot.slane %v433, 4
        %v471 = vmax.f32 %v433, %v470
        %v472 = vrot.slane %v471, 2
        %v473 = vmax.f32 %v471, %v472
        %v474 = vrot.slane %v473, 1
        %v475 = vmax.f32 %v473, %v474
        %v476 = vrot.slane %v436, 4
        %v477 = vmax.f32 %v436, %v476
        %v478 = vrot.slane %v477, 2
        %v479 = vmax.f32 %v477, %v478
        %v480 = vrot.slane %v479, 1
        %v481 = vmax.f32 %v479, %v480
        %v482 = vrot.slane %v439, 4
        %v483 = vmax.f32 %v439, %v482
        %v484 = vrot.slane %v483, 2
        %v485 = vmax.f32 %v483, %v484
        %v486 = vrot.slane %v485, 1
        %v487 = vmax.f32 %v485, %v486
        %v488 = vsub.f32 %v418, %v445
        %v489 = vsub.f32 %v421, %v451
        %v490 = vsub.f32 %v424, %v457
        %v491 = vsub.f32 %v427, %v463
        %v492 = vsub.f32 %v430, %v469
        %v493 = vsub.f32 %v433, %v475
        %v494 = vsub.f32 %v436, %v481
        %v495 = vsub.f32 %v439, %v487
        %v496 = vmul.f32 %v488, 1.442695
        %v497 = vpow.pop %v496
        %v498 = vmul.f32 %v489, 1.442695
        %v499 = vpow.pop %v498
        %v500 = vmul.f32 %v490, 1.442695
        %v501 = vpow.pop %v500
        %v502 = vmul.f32 %v491, 1.442695
        %v503 = vpow.pop %v502
        %v504 = vmul.f32 %v492, 1.442695
        %v505 = vpow.pop %v504
        %v506 = vmul.f32 %v493, 1.442695
        %v507 = vpow.pop %v506
        %v508 = vmul.f32 %v494, 1.442695
        %v509 = vpow.pop %v508
        %v510 = vmul.f32 %v495, 1.442695
        %v511 = vpow.pop %v510
        %v512 = vrot.slane %v497, 4
        %v513 = vadd.f32 %v497, %v512
        %v514 = vrot.slane %v513, 2
        %v515 = vadd.f32 %v513, %v514
        %v516 = vrot.slane %v515, 1
        %v517 = vadd.f32 %v515, %v516
        %v518 = vrot.slane %v499, 4
        %v519 = vadd.f32 %v499, %v518
        %v520 = vrot.slane %v519, 2
        %v521 = vadd.f32 %v519, %v520
        %v522 = vrot.slane %v521, 1
        %v523 = vadd.f32 %v521, %v522
        %v524 = vrot.slane %v501, 4
        %v525 = vadd.f32 %v501, %v524
        %v526 = vrot.slane %v525, 2
        %v527 = vadd.f32 %v525, %v526
        %v528 = vrot.slane %v527, 1
        %v529 = vadd.f32 %v527, %v528
        %v530 = vrot.slane %v503, 4
        %v531 = vadd.f32 %v503, %v530
        %v532 = vrot.slane %v531, 2
        %v533 = vadd.f32 %v531, %v532
        %v534 = vrot.slane %v533, 1
        %v535 = vadd.f32 %v533, %v534
        %v536 = vrot.slane %v505, 4
        %v537 = vadd.f32 %v505, %v536
        %v538 = vrot.slane %v537, 2
        %v539 = vadd.f32 %v537, %v538
        %v540 = vrot.slane %v539, 1
        %v541 = vadd.f32 %v539, %v540
        %v542 = vrot.slane %v507, 4
        %v543 = vadd.f32 %v507, %v542
        %v544 = vrot.slane %v543, 2
        %v545 = vadd.f32 %v543, %v544
        %v546 = vrot.slane %v545, 1
        %v547 = vadd.f32 %v545, %v546
        %v548 = vrot.slane %v509, 4
        %v549 = vadd.f32 %v509, %v548
        %v550 = vrot.slane %v549, 2
        %v551 = vadd.f32 %v549, %v550
        %v552 = vrot.slane %v551, 1
        %v553 = vadd.f32 %v551, %v552
        %v554 = vrot.slane %v511, 4
        %v555 = vadd.f32 %v511, %v554
        %v556 = vrot.slane %v555, 2
        %v557 = vadd.f32 %v555, %v556
        %v558 = vrot.slane %v557, 1
        %v559 = vadd.f32 %v557, %v558
        %v560 = vrcp.pop %v517
        %v561 = vrcp.pop %v523
        %v562 = vrcp.pop %v529
        %v563 = vrcp.pop %v535
        %v564 = vrcp.pop %v541
        %v565 = vrcp.pop %v547
        %v566 = vrcp.pop %v553
        %v567 = vrcp.pop %v559
        %v568 = vmul.f32 %v497, %v560
        %v569 = vmul.f32 %v499, %v561
        %v570 = vmul.f32 %v501, %v562
        %v571 = vmul.f32 %v503, %v563
        %v572 = vmul.f32 %v505, %v564
        %v573 = vmul.f32 %v507, %v565
        %v574 = vmul.f32 %v509, %v566
        %v575 = vmul.f32 %v511, %v567
        %v576 = vlaneseq
        %v577 = vshrl.u32 %v576, 7
        %v578 = vlaneseq
        %v579 = vand.u32 %v578, 127
        %v580 = vmul.u32 %v577, 8
        %vm581 = vcmp.ge.s32.totalorder %v579, %v580
        %v582 = vadd.s32 %v577, 1
        %v583 = vmul.u32 %v582, 8
        %vm584 = vcmp.lt.s32.totalorder %v579, %v583
        %vm585 = vmand %vm581, %vm584
        %v586 = vsel %vm585, 1.0, 0.0
        %v587 = vld [vmem:[%s237] sm:$0xff]
        %v588 = vld [vmem:[%s237 + $0x8] sm:$0xff]
        %v589 = vld [vmem:[%s237 + $0x10] sm:$0xff]
        %v590 = vld [vmem:[%s237 + $0x18] sm:$0xff]
        %v591 = vld [vmem:[%s237 + $0x20] sm:$0xff]
        %v592 = vld [vmem:[%s237 + $0x28] sm:$0xff]
        %v593 = vld [vmem:[%s237 + $0x30] sm:$0xff]
        %v594 = vld [vmem:[%s237 + $0x38] sm:$0xff]
        %v595 = vmul.f32 %v568, %v587
        %v596 = vmul.f32 %v569, %v588
        %v597 = vmul.f32 %v570, %v589
        %v598 = vmul.f32 %v571, %v590
        %v599 = vmul.f32 %v572, %v591
        %v600 = vmul.f32 %v573, %v592
        %v601 = vmul.f32 %v574, %v593
        %v602 = vmul.f32 %v575, %v594
        %v604 = vsel %vm262, %v586, 0
        %606 = vmatprep.subr.mxu0 0.0
        %607 = vmatpush1.msra.mxu0 %v595
        %608 = vmatprep.subr.mxu0 0.0
        %609 = vmatpush1.msra.mxu0 %v596
        %610 = vmatprep.subr.mxu0 0.0
        %611 = vmatpush1.msra.mxu0 %v597
        %612 = vmatprep.subr.mxu0 0.0
        %613 = vmatpush1.msra.mxu0 %v598
        %614 = vmatprep.subr.mxu0 0.0
        %615 = vmatpush1.msra.mxu0 %v599
        %616 = vmatprep.subr.mxu0 0.0
        %617 = vmatpush1.msra.mxu0 %v600
        %618 = vmatprep.subr.mxu0 0.0
        %619 = vmatpush1.msra.mxu0 %v601
        %620 = vmatprep.subr.mxu0 0.0
        %621 = vmatpush1.msra.mxu0 %v602
        %622 = vmatprep.subr.mxu0 0.0
        %623 = vmatpush1.msra.mxu0 0.0
        %624 = vmatprep.subr.mxu0 0.0
        %625 = vmatpush1.msra.mxu0 0.0
        %626 = vmatprep.subr.mxu0 0.0
        %627 = vmatpush1.msra.mxu0 0.0
        %628 = vmatprep.subr.mxu0 0.0
        %629 = vmatpush1.msra.mxu0 0.0
        %630 = vmatprep.subr.mxu0 0.0
        %631 = vmatpush1.msra.mxu0 0.0
        %632 = vmatprep.subr.mxu0 0.0
        %633 = vmatpush1.msra.mxu0 0.0
        %634 = vmatprep.subr.mxu0 0.0
        %635 = vmatpush1.msra.mxu0 0.0
        %636 = vmatprep.subr.mxu0 0.0
        %637 = vmatpush1.msra.mxu0 0.0
        %638 = vmatprep.subr.mxu0 0.0
        %639 = vmatpush1.msra.mxu0 0.0
        %640 = vmatprep.subr.mxu0 0.0
        %641 = vmatpush1.msra.mxu0 0.0
        %642 = vmatprep.subr.mxu0 0.0
        %643 = vmatpush1.msra.mxu0 0.0
        %644 = vmatprep.subr.mxu0 0.0
        %645 = vmatpush1.msra.mxu0 0.0
        %646 = vmatprep.subr.mxu0 0.0
        %647 = vmatpush1.msra.mxu0 0.0
        %648 = vmatprep.subr.mxu0 0.0
        %649 = vmatpush1.msra.mxu0 0.0
        %650 = vmatprep.subr.mxu0 0.0
        %651 = vmatpush1.msra.mxu0 0.0
        %652 = vmatprep.subr.mxu0 0.0
        %653 = vmatpush1.msra.mxu0 0.0
        %654 = vmatprep.subr.mxu0 0.0
        %655 = vmatpush1.msra.mxu0 0.0
        %656 = vmatprep.subr.mxu0 0.0
        %657 = vmatpush1.msra.mxu0 0.0
        %658 = vmatprep.subr.mxu0 0.0
        %659 = vmatpush1.msra.mxu0 0.0
        %660 = vmatprep.subr.mxu0 0.0
        %661 = vmatpush1.msra.mxu0 0.0
        %662 = vmatprep.subr.mxu0 0.0
        %663 = vmatpush1.msra.mxu0 0.0
        %664 = vmatprep.subr.mxu0 0.0
        %665 = vmatpush1.msra.mxu0 0.0
        %666 = vmatprep.subr.mxu0 0.0
        %667 = vmatpush1.msra.mxu0 0.0
        %668 = vmatprep.subr.mxu0 0.0
        %669 = vmatpush1.msra.mxu0 0.0
        %670 = vmatprep.mubr.f32.mxu0 0.0
        %671 = vmatmul.mubr.f32.gmra.mrb[0].mxu0 %v604
        %v672 = vpop.f32.mrb[0].mxu0
        %v673 = vadd.f32 0.0, %v672
        %v674 = vpop.f32.mrb[0].mxu0
        %675 = vdwg.mxu0
        %v676 = vmul.f32 %v673, %v673
        %v677 = vsel %vm392, %v676, 0.0
        %678 = vadd.xlane.f32.xlu0 %v677
        %v679 = vpop.xlane.xlu0 %678
        %v680 = vadd.f32 %v679, 1e-12
        %v681 = vrsqrt.pop %v680
        %v682 = vmul.f32 %v673, %v681
        %683 = vst.msk [vmem:[%s226] sm:$0xff] %vm392, %v682
        %s684 = smul.u32 8, %s20
        %p685 = scmp.lt.s32.totalorder %s684, 15
        %s686 = scalar_select %p685, %s684, 15
        %s687 = smul.addr %s686, 8
        %s688 = scalar_lea.vmem %s4, %s687
        %s689 = sand.u32 %s143, 1
        %s690 = scalar_lea.sflag [#allocation3], %s689
        %s691 = sand.u32 %s143, 1
        %s692 = smul.addr %s691, 8
        %s693 = scalar_lea.vmem [#allocation2], %s692
        // Predicated region
        $region37: #{tpu_custom_call.1} parent=35 // pred_check
          %p694 = pneg %p127
        $region38: #{tpu_custom_call.1} parent=35 // pred_check_branch
          %696 = sbr.rel (%p694) target = $region40
        $region39: #{tpu_custom_call.1} parent=35 // pred_region
          %s697 = smul.u32 8, %s20
        $region40: #{tpu_custom_call.1} parent=35 // pred_fallthru
          _
        // Predicated region
        $region41: #{tpu_custom_call.1} parent=35 // pred_check
          %p698 = pneg %p153
        $region42: #{tpu_custom_call.1} parent=35 // pred_check_branch
          %700 = sbr.rel (%p698) target = $region44
        $region43: #{tpu_custom_call.1} parent=35 // pred_region
          %s702 = ssub.s32 128, 128
          %703 = vsyncadd %s690, %s702
          %s704 = smul.addr %s20, 128
          %s705 = scalar_lea.hbm %s5, %s704
          %s707 = sshll.u32 %s693, 4
          %s708 = int_to_ptr.vmem [resolvable:$true] %s707
          %710 = dma.vmem_to_hbm [thread:$0]  %s708, 128, %s705, %s690
        $region44: #{tpu_custom_call.1} parent=35 // pred_fallthru
          _
      $region36: #{tpu_custom_call.1} parent=5 // pred_fallthru
        _
      %p711 = scmp.le.s32.totalorder 2, %s15
      // Predicated region
      $region45: #{tpu_custom_call.1} parent=5 // pred_check
        %p712 = pneg %p711
      $region46: #{tpu_custom_call.1} parent=5 // pred_check_branch
        %714 = sbr.rel (%p712) target = $region48
      $region47: #{tpu_custom_call.1} parent=5 // pred_region
        %s715 = ssub.s32 %s15, 2
        // Predicated region
        $region49: #{tpu_custom_call.1} parent=47 // pred_check
          %p716 = pneg %p133
        $region50: #{tpu_custom_call.1} parent=47 // pred_check_branch
          %718 = sbr.rel (%p716) target = $region52
        $region51: #{tpu_custom_call.1} parent=47 // pred_region
          %s719 = smul.u32 8, %s21
          %p720 = scmp.lt.s32.totalorder %s719, 15
          %s721 = scalar_select %p720, %s719, 15
          %s722 = smul.addr %s721, 8
          %s723 = scalar_lea.vmem %s4, %s722
        $region52: #{tpu_custom_call.1} parent=47 // pred_fallthru
          _
        // Predicated region
        $region53: #{tpu_custom_call.1} parent=47 // pred_check
          %p724 = pneg %p159
        $region54: #{tpu_custom_call.1} parent=47 // pred_check_branch
          %726 = sbr.rel (%p724) target = $region56
        $region55: #{tpu_custom_call.1} parent=47 // pred_region
          %s727 = sand.u32 %s144, 1
          %s728 = scalar_lea.sflag [#allocation3], %s727
          %s729 = sand.u32 %s144, 1
          %s730 = smul.addr %s729, 8
          %s731 = scalar_lea.vmem [#allocation2], %s730
          %732 = dma.done %s728, 128
        $region56: #{tpu_custom_call.1} parent=47 // pred_fallthru
          _
      $region48: #{tpu_custom_call.1} parent=5 // pred_fallthru
        _
    $region6: #{tpu_custom_call.1} parent=1 // loop_footer
      %s19 = sadd.s32 1, %s15
    $region7: #{tpu_custom_call.1} parent=1 // loop_footer_branch
      %14 = sbr.rel target = $region3
    $region8: #{tpu_custom_call.1} parent=1 // loop_exit
      _
    %733 = vsyncpa [#allocation3], 1
    %s734 = scalar_lea.sflag [#allocation3], 1
    %735 = vsyncpa %s734, 1

</llo_original>
